<compile_context>
chip_gen: v5e
topology: v5e:2x2
jax: 0.10.0
libtpu: 0.0.40
codegen_flags: <defaults>
</compile_context>

<pallas_src>
import functools

import jax
import jax.numpy as jnp
from jax.experimental import pallas as pl
from jax.experimental.pallas import tpu as pltpu


# ---------------------------------------------------------------------------
# Helpers
# ---------------------------------------------------------------------------
def _round_up(v, m):
    return ((v + m - 1) // m) * m


_VMEM_LIMIT = 48 * 1024 * 1024       # explicit scoped-VMEM budget (safe on v7x's 64 MiB)
_X_RESIDENT_BYTES = 8 * 1024 * 1024  # keep X fully resident in VMEM below this size


def _choose_tiles(n):
    """Pick (n_pad, tm, tk).

    n is padded to a multiple of the K tile so tiles never degrade to 128;
    tm is large (fewer epilogues, less per-step overhead) but capped at
    n_pad/2 so v7x's two TensorCores both receive row tiles."""
    n_pad = _round_up(max(n, 1), 128)
    if n_pad <= 256:
        return n_pad, n_pad, n_pad            # tiny graph: single tile
    tk = 512
    n_pad = _round_up(n, tk)
    tm = min(1024, n_pad // 2)
    while n_pad % tm:
        tm -= 128
    return n_pad, tm, tk


# ---------------------------------------------------------------------------
# Pallas kernels
# ---------------------------------------------------------------------------
def _gcn_layer_kernel_xres(adj_ref, x_ref, w_ref, b_ref, h_ref, acc_ref, *, tk):
    """GCNConv + ReLU with X fully resident in VMEM (DMA'd once).

    acc[i] += Â[i,k] @ X[k*tk : (k+1)*tk]      (bf16 operands, f32 accumulate)
    at k == last:  h[i] = relu(acc[i] @ W + b) (f32 epilogue, bf16 store)
    """
    k = pl.program_id(1)

    @pl.when(k == 0)
    def _():
        acc_ref[...] = jnp.zeros_like(acc_ref)

    x_blk = x_ref[pl.ds(pl.multiple_of(k * tk, 128), tk), :]
    acc_ref[...] += jnp.dot(adj_ref[...], x_blk,
                            preferred_element_type=jnp.float32)

    @pl.when(k == pl.num_programs(1) - 1)
    def _():
        ax = acc_ref[...].astype(jnp.bfloat16)
        axw = jnp.dot(ax, w_ref[...], preferred_element_type=jnp.float32)
        h_ref[...] = jnp.maximum(axw + b_ref[...], 0.0).astype(h_ref.dtype)


def _gcn_layer_kernel_stream(adj_ref, x_ref, w_ref, b_ref, h_ref, acc_ref):
    """Fallback for very large graphs: X streamed in (tk, f_pad) tiles."""
    k = pl.program_id(1)

    @pl.when(k == 0)
    def _():
        acc_ref[...] = jnp.zeros_like(acc_ref)

    acc_ref[...] += jnp.dot(adj_ref[...], x_ref[...],
                            preferred_element_type=jnp.float32)

    @pl.when(k == pl.num_programs(1) - 1)
    def _():
        ax = acc_ref[...].astype(jnp.bfloat16)
        axw = jnp.dot(ax, w_ref[...], preferred_element_type=jnp.float32)
        h_ref[...] = jnp.maximum(axw + b_ref[...], 0.0).astype(h_ref.dtype)


def gcn_layer(adj_bf, x_bf, w_bf, b_f32, *, tm, tk):
    n_pad = adj_bf.shape[0]
    f_pad = x_bf.shape[1]
    dim_p = w_bf.shape[1]
    grid = (n_pad // tm, n_pad // tk)

    x_resident = (x_bf.size * 2) <= _X_RESIDENT_BYTES
    if x_resident:
        kernel = functools.partial(_gcn_layer_kernel_xres, tk=tk)
        # constant block index -> X DMA'd once, reused across the whole grid
        x_spec = pl.BlockSpec((n_pad, f_pad), lambda i, k: (0, 0))
    else:
        # TODO(synk): large-graph fallback still re-reads X once per row tile.
        kernel = _gcn_layer_kernel_stream
        x_spec = pl.BlockSpec((tk, f_pad), lambda i, k: (k, 0))

    return pl.pallas_call(
        kernel,
        out_shape=jax.ShapeDtypeStruct((n_pad, dim_p), jnp.bfloat16),
        grid_spec=pltpu.PrefetchScalarGridSpec(
            num_scalar_prefetch=0,
            grid=grid,
            in_specs=[
                pl.BlockSpec((tm, tk), lambda i, k: (i, k)),        # Â tile stream
                x_spec,                                             # X (resident or streamed)
                pl.BlockSpec((f_pad, dim_p), lambda i, k: (0, 0)),  # W resident
                pl.BlockSpec((1, dim_p), lambda i, k: (0, 0)),      # bias resident
            ],
            out_specs=pl.BlockSpec((tm, dim_p), lambda i, k: (i, 0)),
            scratch_shapes=[pltpu.VMEM((tm, f_pad), jnp.float32)],
        ),
        compiler_params=pltpu.CompilerParams(
            dimension_semantics=("parallel", "arbitrary"),
            vmem_limit_bytes=_VMEM_LIMIT,
        ),
    )(adj_bf, x_bf, w_bf, b_f32)


def _make_pool_kernel(num_layers):
    def kernel(p_ref, *refs):
        h_refs = refs[:num_layers]
        o_ref = refs[num_layers]
        k = pl.program_id(0)

        @pl.when(k == 0)
        def _():
            o_ref[...] = jnp.zeros_like(o_ref)

        p_blk = p_ref[...]
        parts = [jnp.dot(p_blk, h_refs[l][...], preferred_element_type=jnp.float32)
                 for l in range(num_layers)]
        o_ref[...] += jnp.concatenate(parts, axis=1)

    return kernel


def global_mean_pool_mm(pool_bf, hs, *, tk):
    """global_mean_pool for all layers in one launch, no concat slab:
    out[:, l*dim_p:(l+1)*dim_p] = P @ hs[l]   (K-tiled, f32 accumulate)."""
    g_pad, n_pad = pool_bf.shape
    num_layers = len(hs)
    dim_p = hs[0].shape[1]
    c = num_layers * dim_p
    return pl.pallas_call(
        _make_pool_kernel(num_layers),
        out_shape=jax.ShapeDtypeStruct((g_pad, c), jnp.float32),
        grid_spec=pltpu.PrefetchScalarGridSpec(
            num_scalar_prefetch=0,
            grid=(n_pad // tk,),
            in_specs=[pl.BlockSpec((g_pad, tk), lambda k: (0, k))]
                     + [pl.BlockSpec((tk, dim_p), lambda k: (k, 0))
                        for _ in range(num_layers)],
            out_specs=pl.BlockSpec((g_pad, c), lambda k: (0, 0)),
        ),
        compiler_params=pltpu.CompilerParams(
            dimension_semantics=("arbitrary",),
            vmem_limit_bytes=_VMEM_LIMIT,
        ),
    )(pool_bf, *hs)


# ---------------------------------------------------------------------------
# Glue: build Â (GCN-normalized dense adjacency) and pooling matrix P
# (scatter construction has no clean Pallas equivalent -> plain JAX)
# ---------------------------------------------------------------------------
def build_norm_adj(edge_index, num_nodes):
    """Dense Â = D^-1/2 (A + I) D^-1/2, matching PyG GCNConv defaults."""
    src = edge_index[0]
    tgt = edge_index[1]
    a = jnp.zeros((num_nodes, num_nodes), jnp.float32)
    a = a.at[tgt, src].add(1.0)                              # messages src -> tgt
    a = a + jnp.eye(num_nodes, dtype=jnp.float32)            # self loops
    deg = a.sum(axis=1)
    dinv = jnp.where(deg > 0, 1.0 / jnp.sqrt(deg), 0.0)
    return dinv[:, None] * a * dinv[None, :]


def build_pool_matrix(batch, num_graphs, num_nodes):
    """P[g, n] = 1/|graph g| if batch[n] == g else 0  (so P @ X = global_mean_pool)."""
    onehot = (batch[None, :] == jnp.arange(num_graphs)[:, None]).astype(jnp.float32)
    counts = onehot.sum(axis=1, keepdims=True)
    return onehot / jnp.maximum(counts, 1.0)


# ---------------------------------------------------------------------------
# Encoder_GCN forward
# ---------------------------------------------------------------------------
def encoder_gcn_forward(x, edge_index, batch, params, num_graphs):
    """Returns (xpool_cat [G, L*dim], xs_cat [N, L*dim]) like the PyTorch module."""
    n, f = x.shape
    num_layers = len(params)
    dim = params[0][0].shape[1]

    n_pad, tm, tk = _choose_tiles(n)
    f_pad = _round_up(f, 128)
    dim_p = _round_up(dim, 128)
    g_pad = _round_up(num_graphs, 8)

    adj = build_norm_adj(edge_index, n)
    pool = build_pool_matrix(batch, num_graphs, n)

    adj_bf = jnp.pad(adj, ((0, n_pad - n), (0, n_pad - n))).astype(jnp.bfloat16)
    pool_bf = jnp.pad(pool, ((0, g_pad - num_graphs), (0, n_pad - n))).astype(jnp.bfloat16)

    h = jnp.pad(x, ((0, n_pad - n), (0, f_pad - f))).astype(jnp.bfloat16)

    # TODO(synk): fuse this layer loop into one pallas_call with a resident Â
    #             panel to remove the L-times re-streaming of Â from HBM.
    hs = []
    for li, (w, b) in enumerate(params):
        d_in = w.shape[0]
        d_in_p = f_pad if li == 0 else dim_p
        w_bf = jnp.pad(w, ((0, d_in_p - d_in), (0, dim_p - dim))).astype(jnp.bfloat16)
        b_p = jnp.pad(b, ((0, 0), (0, dim_p - dim))).astype(jnp.float32)
        h = gcn_layer(adj_bf, h, w_bf, b_p, tm=tm, tk=tk)
        hs.append(h)

    # Single pooling launch over the L per-layer hidden arrays (no concat slab).
    pooled = global_mean_pool_mm(pool_bf, hs, tk=tk)        # [g_pad, L*dim_p] f32

    xpool_cat = jnp.concatenate(
        [pooled[:num_graphs, li * dim_p: li * dim_p + dim] for li in range(num_layers)],
        axis=1)
    xs_cat = jnp.concatenate(
        [hs[li][:n, :dim].astype(jnp.float32) for li in range(num_layers)], axis=1)
    return xpool_cat, xs_cat


def init_params(key, num_features, dim, num_gc_layers):
    params = []
    for i in range(num_gc_layers):
        d_in = num_features if i == 0 else dim
        key, kw = jax.random.split(key)
        lim = (6.0 / (d_in + dim)) ** 0.5
        w = jax.random.uniform(kw, (d_in, dim), jnp.float32, -lim, lim)
        b = jnp.zeros((1, dim), jnp.float32)                # PyG GCNConv bias init
        params.append((w, b))
    return params


# ---------------------------------------------------------------------------
# Pure-JAX reference mirroring the kernel's mixed-precision math
# (bf16 matmul operands, f32 accumulation, f32 bias/ReLU)
# ---------------------------------------------------------------------------
def reference_forward(x, edge_index, batch, params, num_graphs):
    n = x.shape[0]
    adj = build_norm_adj(edge_index, n).astype(jnp.bfloat16)
    pool = build_pool_matrix(batch, num_graphs, n).astype(jnp.bfloat16)
    h = x.astype(jnp.bfloat16)
    xs = []
    for (w, b) in params:
        ax = jnp.dot(adj, h, preferred_element_type=jnp.float32).astype(jnp.bfloat16)
        hf = jnp.maximum(
            jnp.dot(ax, w.astype(jnp.bfloat16), preferred_element_type=jnp.float32) + b,
            0.0)
        h = hf.astype(jnp.bfloat16)
        xs.append(h)
    xpool = [jnp.dot(pool, hi, preferred_element_type=jnp.float32) for hi in xs]
    return (jnp.concatenate(xpool, axis=1).astype(jnp.float32),
            jnp.concatenate([hi.astype(jnp.float32) for hi in xs], axis=1))


if __name__ == "__main__":
    num_features = 8
    dim = 32
    num_gc_layers = 3
    nodes_per_graph = 8
    num_graphs = 2
    n = nodes_per_graph * num_graphs

    key = jax.random.PRNGKey(0)
    key, kx = jax.random.split(key)
    x = jax.random.normal(kx, (n, num_features), jnp.float32)

    # batch assignment: first 8 nodes -> graph 0, next 8 -> graph 1
    batch = jnp.repeat(jnp.arange(num_graphs), nodes_per_graph)

    # edges: undirected ring within each graph
    src_list, tgt_list = [], []
    for g in range(num_graphs):
        base = g * nodes_per_graph
        for i in range(nodes_per_graph):
            a = base + i
            b = base + (i + 1) % nodes_per_graph
            src_list += [a, b]
            tgt_list += [b, a]
    edge_index = jnp.array([src_list, tgt_list], dtype=jnp.int32)

    params = init_params(key, num_features, dim, num_gc_layers)

    xpool_cat, xs_cat = encoder_gcn_forward(x, edge_index, batch, params, num_graphs)
    xpool_cat = jax.block_until_ready(xpool_cat)
    xs_cat = jax.block_until_ready(xs_cat)

    # sanity-check against the mixed-precision-matched reference
    ref_pool, ref_xs = reference_forward(x, edge_index, batch, params, num_graphs)
    assert xpool_cat.shape == (num_graphs, num_gc_layers * dim)
    assert xs_cat.shape == (n, num_gc_layers * dim)
    assert jnp.allclose(xpool_cat, ref_pool, atol=1e-2, rtol=1e-2)
    assert jnp.allclose(xs_cat, ref_xs, atol=1e-2, rtol=1e-2)

    print("KERNEL_OK")
</pallas_src>

<mosaic_0001>
module attributes {stable_mosaic.version = 11 : i64} {
  func.func @_gcn_layer_kernel_xres(%arg0: i32, %arg1: i32, %arg2: memref<128x128xbf16, #tpu.memory_space<vmem>>, %arg3: memref<128x128xbf16, #tpu.memory_space<vmem>>, %arg4: memref<128x128xbf16, #tpu.memory_space<vmem>>, %arg5: memref<1x128xf32, #tpu.memory_space<vmem>>, %arg6: memref<128x128xbf16, #tpu.memory_space<vmem>>, %arg7: memref<128x128xf32, #tpu.memory_space<vmem>>) attributes {dimension_semantics = [#tpu.dimension_semantics<parallel>, #tpu.dimension_semantics<arbitrary>], iteration_bounds = array<i64: 1, 1>, scalar_prefetch = 0 : i64, scratch_operands = 1 : i64, tpu.core_type = #tpu.core_type<tc>, window_params = [{transform_indices = @transform_0, window_bounds = array<i64: 128, 128>}, {pipeline_mode = #tpu.pipeline_mode<synchronous>, transform_indices = @transform_1, window_bounds = array<i64: 128, 128>}, {pipeline_mode = #tpu.pipeline_mode<synchronous>, transform_indices = @transform_2, window_bounds = array<i64: 128, 128>}, {pipeline_mode = #tpu.pipeline_mode<synchronous>, transform_indices = @transform_3, window_bounds = array<i64: 1, 128>}, {transform_indices = @transform_4, window_bounds = array<i64: 128, 128>}]} {
    %c0_i32 = arith.constant 0 : i32
    %0 = arith.cmpi eq, %arg1, %c0_i32 : i32
    %1 = arith.extui %0 : i1 to i32
    %c0_i32_0 = arith.constant 0 : i32
    %2 = arith.cmpi ne, %1, %c0_i32_0 : i32
    scf.if %2 {
      %cst_9 = arith.constant 0.000000e+00 : f32
      %15 = vector.broadcast %cst_9 : f32 to vector<128x128xf32>
      %c0_10 = arith.constant 0 : index
      %c0_11 = arith.constant 0 : index
      %16 = vector.load %arg7[%c0_10, %c0_11] : memref<128x128xf32, #tpu.memory_space<vmem>>, vector<128x128xf32>
      tpu.vector_store %arg7[%c0_10, %c0_11], %15 {strides = array<i32>} : memref<128x128xf32, #tpu.memory_space<vmem>>, vector<128x128xf32>,
    } else {
    }
    %c128_i32 = arith.constant 128 : i32
    %3 = arith.muli %arg1, %c128_i32 : i32
    %4 = tpu.assume_multiple %3, 128 : i32
    %5 = arith.index_cast %4 : i32 to index
    %c0 = arith.constant 0 : index
    %6 = vector.load %arg3[%5, %c0] : memref<128x128xbf16, #tpu.memory_space<vmem>>, vector<128x128xbf16>
    %c0_1 = arith.constant 0 : index
    %c0_2 = arith.constant 0 : index
    %7 = vector.load %arg7[%c0_1, %c0_2] : memref<128x128xf32, #tpu.memory_space<vmem>>, vector<128x128xf32>
    %c0_3 = arith.constant 0 : index
    %c0_4 = arith.constant 0 : index
    %8 = vector.load %arg2[%c0_3, %c0_4] : memref<128x128xbf16, #tpu.memory_space<vmem>>, vector<128x128xbf16>
    %cst = arith.constant dense<0.000000e+00> : vector<128x128xf32>
    %9 = tpu.matmul %8, %6, %cst {dimension_numbers = #tpu.dot_dimension_numbers<[1], [0], [0], [1], [0, 0, 1, 1], [], []>} : vector<128x128xbf16>, vector<128x128xbf16>, vector<128x128xf32> -> vector<128x128xf32>
    %10 = arith.addf %7, %9 : vector<128x128xf32>
    %c0_5 = arith.constant 0 : index
    %c0_6 = arith.constant 0 : index
    %11 = vector.load %arg7[%c0_5, %c0_6] : memref<128x128xf32, #tpu.memory_space<vmem>>, vector<128x128xf32>
    tpu.vector_store %arg7[%c0_5, %c0_6], %10 {strides = array<i32>} : memref<128x128xf32, #tpu.memory_space<vmem>>, vector<128x128xf32>,
    %c0_i32_7 = arith.constant 0 : i32
    %12 = arith.cmpi eq, %arg1, %c0_i32_7 : i32
    %13 = arith.extui %12 : i1 to i32
    %c0_i32_8 = arith.constant 0 : i32
    %14 = arith.cmpi ne, %13, %c0_i32_8 : i32
    scf.if %14 {
      %c0_9 = arith.constant 0 : index
      %c0_10 = arith.constant 0 : index
      %15 = vector.load %arg7[%c0_9, %c0_10] : memref<128x128xf32, #tpu.memory_space<vmem>>, vector<128x128xf32>
      %16 = arith.truncf %15 : vector<128x128xf32> to vector<128x128xbf16>
      %c0_11 = arith.constant 0 : index
      %c0_12 = arith.constant 0 : index
      %17 = vector.load %arg4[%c0_11, %c0_12] : memref<128x128xbf16, #tpu.memory_space<vmem>>, vector<128x128xbf16>
      %cst_13 = arith.constant dense<0.000000e+00> : vector<128x128xf32>
      %18 = tpu.matmul %16, %17, %cst_13 {dimension_numbers = #tpu.dot_dimension_numbers<[1], [0], [0], [1], [0, 0, 1, 1], [], []>} : vector<128x128xbf16>, vector<128x128xbf16>, vector<128x128xf32> -> vector<128x128xf32>
      %c0_14 = arith.constant 0 : index
      %c0_15 = arith.constant 0 : index
      %19 = vector.load %arg5[%c0_14, %c0_15] : memref<1x128xf32, #tpu.memory_space<vmem>>, vector<1x128xf32>
      %20 = vector.broadcast %19 : vector<1x128xf32> to vector<128x128xf32>
      %21 = arith.addf %18, %20 : vector<128x128xf32>
      %cst_16 = arith.constant 0.000000e+00 : f32
      %22 = vector.broadcast %cst_16 : f32 to vector<128x128xf32>
      %23 = arith.maximumf %21, %22 : vector<128x128xf32>
      %24 = arith.truncf %23 : vector<128x128xf32> to vector<128x128xbf16>
      %c0_17 = arith.constant 0 : index
      %c0_18 = arith.constant 0 : index
      %25 = vector.load %arg6[%c0_17, %c0_18] : memref<128x128xbf16, #tpu.memory_space<vmem>>, vector<128x128xbf16>
      tpu.vector_store %arg6[%c0_17, %c0_18], %24 {strides = array<i32>} : memref<128x128xbf16, #tpu.memory_space<vmem>>, vector<128x128xbf16>,
    } else {
    }
    return
  }
  func.func @transform_0(%arg0: i32, %arg1: i32) -> (i32, i32) {
    %c0_i32 = arith.constant 0 : i32
    return %arg0, %arg1 : i32, i32
  }
  func.func @transform_1(%arg0: i32, %arg1: i32) -> (i32, i32) {
    %c0_i32 = arith.constant 0 : i32
    %c0_i32_0 = arith.constant 0 : i32
    %c0_i32_1 = arith.constant 0 : i32
    return %c0_i32, %c0_i32_0 : i32, i32
  }
  func.func @transform_2(%arg0: i32, %arg1: i32) -> (i32, i32) {
    %c0_i32 = arith.constant 0 : i32
    %c0_i32_0 = arith.constant 0 : i32
    %c0_i32_1 = arith.constant 0 : i32
    return %c0_i32, %c0_i32_0 : i32, i32
  }
  func.func @transform_3(%arg0: i32, %arg1: i32) -> (i32, i32) {
    %c0_i32 = arith.constant 0 : i32
    %c0_i32_0 = arith.constant 0 : i32
    %c0_i32_1 = arith.constant 0 : i32
    return %c0_i32, %c0_i32_0 : i32, i32
  }
  func.func @transform_4(%arg0: i32, %arg1: i32) -> (i32, i32) {
    %c0_i32 = arith.constant 0 : i32
    %c0_i32_0 = arith.constant 0 : i32
    return %arg0, %c0_i32 : i32, i32
  }
}

</mosaic_0001>

<llo_original>
// kernel: tpu_custom_call.1
$region0: #{tpu_custom_call.1}
  #allocation0 [shape = 'u32[]', space=smem, size = 0x4, offset = 0x4, fixed_abs, tag = 'smem constant byte address 0x4 - core index']
  #allocation1 [shape = 'u32[72,128]{1,0:T(1,128)}', space=vmem, size = 0x9000, scoped, tag = 'internal scratch']
  #allocation2 [shape = 'f32[128,128]{1,0:T(8,128)}', space=vmem, size = 0x10000, scoped, tag = 'scratch operand']
  %s0 = inlined_call_operand.hbm [shape: bf16[128,128], index: 0, kind: input, shape index: {}]
  %s1 = inlined_call_operand.hbm [shape: bf16[128,128], index: 1, kind: input, shape index: {}]
  %s2 = inlined_call_operand.hbm [shape: bf16[128,128], index: 2, kind: input, shape index: {}]
  %s3 = inlined_call_operand.vmem [shape: f32[1,128], index: 3, kind: input, shape index: {}]
  %s4 = inlined_call_operand.hbm [shape: bf16[128,128], index: 4, kind: output, shape index: {}]
  %s5 = sld [smem:[#allocation0]]
  $region46: #{tpu_custom_call.1} parent=0
    _
  %s7 = ssub.s32 1, %s5
  %s8 = scalar_select 0, %s7, %s5
  $region1: #{tpu_custom_call.1} parent=0
    #allocation3 [shape = 'u8[32768]{0}', space=vmem, size = 0x8000, scoped, tag = 'input window, operand 0, single buffered']
    #allocation4 [shape = 's32[1]{0}', space=sflag, size = 0x4, scoped, tag = 'scoped memory for tpu_custom_call.1']
    #allocation5 [shape = 's32[1]{0}', space=sflag, size = 0x4, scoped, tag = 'scoped memory for tpu_custom_call.1']
    #allocation6 [shape = 'u8[32768]{0}', space=vmem, size = 0x8000, scoped, tag = 'input window, operand 1, single buffered']
    #allocation7 [shape = 's32[1]{0}', space=sflag, size = 0x4, scoped, tag = 'scoped memory for tpu_custom_call.1']
    #allocation8 [shape = 'u8[32768]{0}', space=vmem, size = 0x8000, scoped, tag = 'input window, operand 2, single buffered']
    #allocation9 [shape = 'u8[32768]{0}', space=vmem, size = 0x8000, scoped, tag = 'output window, operand 0, single buffered']
    %9 = vsyncpa [#allocation4], 0
    %10 = vsyncpa [#allocation7], 0
    %11 = vsyncpa [#allocation5], 0
    // Predicated region
    $region2: #{tpu_custom_call.1} parent=1 // pred_check
      _
    $region3: #{tpu_custom_call.1} parent=1 // pred_check_branch
      %13 = sbr.rel (0) target = $region5
    $region4: #{tpu_custom_call.1} parent=1 // pred_region
      %15 = vsyncadd [#allocation4], 0
      %s16 = sshll.u32 %s0, 4
      %s17 = int_to_ptr.hbm [resolvable:$true] %s16
      %s18 = sshll.u32 [#allocation3], 4
      %s19 = int_to_ptr.vmem [resolvable:$true] %s18
      %24 = dma.hbm_to_vmem [thread:$0]  %s17, 1024, %s19, [#allocation4], 64, 64, 4
    $region5: #{tpu_custom_call.1} parent=1 // pred_fallthru
      _
    // Predicated region
    $region6: #{tpu_custom_call.1} parent=1 // pred_check
      _
    $region7: #{tpu_custom_call.1} parent=1 // pred_check_branch
      %26 = sbr.rel (0) target = $region9
    $region8: #{tpu_custom_call.1} parent=1 // pred_region
      %28 = vsyncadd [#allocation7], 0
      %s29 = sshll.u32 %s1, 4
      %s30 = int_to_ptr.hbm [resolvable:$true] %s29
      %s31 = sshll.u32 [#allocation6], 4
      %s32 = int_to_ptr.vmem [resolvable:$true] %s31
      %37 = dma.hbm_to_vmem [thread:$0]  %s30, 1024, %s32, [#allocation7], 64, 64, 4
    $region9: #{tpu_custom_call.1} parent=1 // pred_fallthru
      _
    // Predicated region
    $region10: #{tpu_custom_call.1} parent=1 // pred_check
      _
    $region11: #{tpu_custom_call.1} parent=1 // pred_check_branch
      %39 = sbr.rel (0) target = $region13
    $region12: #{tpu_custom_call.1} parent=1 // pred_region
      %41 = vsyncadd [#allocation7], 0
      %s42 = sshll.u32 %s2, 4
      %s43 = int_to_ptr.hbm [resolvable:$true] %s42
      %s44 = sshll.u32 [#allocation8], 4
      %s45 = int_to_ptr.vmem [resolvable:$true] %s44
      %50 = dma.hbm_to_vmem [thread:$0]  %s43, 1024, %s45, [#allocation7], 64, 64, 4
    $region13: #{tpu_custom_call.1} parent=1 // pred_fallthru
      _
    // Predicated region
    $region14: #{tpu_custom_call.1} parent=1 // pred_check
      _
    $region15: #{tpu_custom_call.1} parent=1 // pred_check_branch
      %52 = sbr.rel (0) target = $region17
    $region16: #{tpu_custom_call.1} parent=1 // pred_region
      _
    $region17: #{tpu_custom_call.1} parent=1 // pred_fallthru
      _
    // Predicated region
    $region18: #{tpu_custom_call.1} parent=1 // pred_check
      _
    $region19: #{tpu_custom_call.1} parent=1 // pred_check_branch
      %54 = sbr.rel (0) target = $region21
    $region20: #{tpu_custom_call.1} parent=1 // pred_region
      %56 = dma.done [#allocation4], 1024
    $region21: #{tpu_custom_call.1} parent=1 // pred_fallthru
      _
    // Predicated region
    $region22: #{tpu_custom_call.1} parent=1 // pred_check
      _
    $region23: #{tpu_custom_call.1} parent=1 // pred_check_branch
      %58 = sbr.rel (0) target = $region25
    $region24: #{tpu_custom_call.1} parent=1 // pred_region
      %60 = dma.done [#allocation7], 1024
    $region25: #{tpu_custom_call.1} parent=1 // pred_fallthru
      _
    // Predicated region
    $region26: #{tpu_custom_call.1} parent=1 // pred_check
      _
    $region27: #{tpu_custom_call.1} parent=1 // pred_check_branch
      %62 = sbr.rel (0) target = $region29
    $region28: #{tpu_custom_call.1} parent=1 // pred_region
      %64 = dma.done [#allocation7], 1024
    $region29: #{tpu_custom_call.1} parent=1 // pred_fallthru
      _
    %p65 = scmp.eq.s32.totalorder 0, 0
    // Predicated region
    $region30: #{tpu_custom_call.1} parent=1 // pred_check
      %p66 = pneg %p65
    $region31: #{tpu_custom_call.1} parent=1 // pred_check_branch
      %68 = sbr.rel (%p66) target = $region33
    $region32: #{tpu_custom_call.1} parent=1 // pred_region
      %69 = vst [vmem:[#allocation2] sm:$0xff] 0.0
      %70 = vst [vmem:[#allocation2 + $0x8] sm:$0xff] 0.0
      %71 = vst [vmem:[#allocation2 + $0x10] sm:$0xff] 0.0
      %72 = vst [vmem:[#allocation2 + $0x18] sm:$0xff] 0.0
      %73 = vst [vmem:[#allocation2 + $0x20] sm:$0xff] 0.0
      %74 = vst [vmem:[#allocation2 + $0x28] sm:$0xff] 0.0
      %75 = vst [vmem:[#allocation2 + $0x30] sm:$0xff] 0.0
      %76 = vst [vmem:[#allocation2 + $0x38] sm:$0xff] 0.0
      %77 = vst [vmem:[#allocation2 + $0x40] sm:$0xff] 0.0
      %78 = vst [vmem:[#allocation2 + $0x48] sm:$0xff] 0.0
      %79 = vst [vmem:[#allocation2 + $0x50] sm:$0xff] 0.0
      %80 = vst [vmem:[#allocation2 + $0x58] sm:$0xff] 0.0
      %81 = vst [vmem:[#allocation2 + $0x60] sm:$0xff] 0.0
      %82 = vst [vmem:[#allocation2 + $0x68] sm:$0xff] 0.0
      %83 = vst [vmem:[#allocation2 + $0x70] sm:$0xff] 0.0
      %84 = vst [vmem:[#allocation2 + $0x78] sm:$0xff] 0.0
    $region33: #{tpu_custom_call.1} parent=1 // pred_fallthru
      _
    %s85 = smul.u32 0, 128
    %s86 = sshra.s32 %s85, 3
    %s87 = sand.u32 %s85, 7
    %s88 = smul.addr %s86, 4
    %s89 = scalar_lea.vmem [#allocation6], %s88
    %v90 = vld [vmem:[%s89] sm:$0xf]
    %v91 = vld [vmem:[%s89 + $0x4] sm:$0xf]
    %v92 = vld [vmem:[%s89 + $0x8] sm:$0xf]
    %v93 = vld [vmem:[%s89 + $0xc] sm:$0xf]
    %v94 = vld [vmem:[%s89 + $0x10] sm:$0xf]
    %v95 = vld [vmem:[%s89 + $0x14] sm:$0xf]
    %v96 = vld [vmem:[%s89 + $0x18] sm:$0xf]
    %v97 = vld [vmem:[%s89 + $0x1c] sm:$0xf]
    %v98 = vld [vmem:[%s89 + $0x20] sm:$0xf]
    %v99 = vld [vmem:[%s89 + $0x24] sm:$0xf]
    %v100 = vld [vmem:[%s89 + $0x28] sm:$0xf]
    %v101 = vld [vmem:[%s89 + $0x2c] sm:$0xf]
    %v102 = vld [vmem:[%s89 + $0x30] sm:$0xf]
    %v103 = vld [vmem:[%s89 + $0x34] sm:$0xf]
    %v104 = vld [vmem:[%s89 + $0x38] sm:$0xf]
    %v105 = vld [vmem:[%s89 + $0x3c] sm:$0xf]
    %v106 = vld [vmem:[#allocation2] sm:$0xff]
    %v107 = vld [vmem:[#allocation2 + $0x8] sm:$0xff]
    %v108 = vld [vmem:[#allocation2 + $0x10] sm:$0xff]
    %v109 = vld [vmem:[#allocation2 + $0x18] sm:$0xff]
    %v110 = vld [vmem:[#allocation2 + $0x20] sm:$0xff]
    %v111 = vld [vmem:[#allocation2 + $0x28] sm:$0xff]
    %v112 = vld [vmem:[#allocation2 + $0x30] sm:$0xff]
    %v113 = vld [vmem:[#allocation2 + $0x38] sm:$0xff]
    %v114 = vld [vmem:[#allocation2 + $0x40] sm:$0xff]
    %v115 = vld [vmem:[#allocation2 + $0x48] sm:$0xff]
    %v116 = vld [vmem:[#allocation2 + $0x50] sm:$0xff]
    %v117 = vld [vmem:[#allocation2 + $0x58] sm:$0xff]
    %v118 = vld [vmem:[#allocation2 + $0x60] sm:$0xff]
    %v119 = vld [vmem:[#allocation2 + $0x68] sm:$0xff]
    %v120 = vld [vmem:[#allocation2 + $0x70] sm:$0xff]
    %v121 = vld [vmem:[#allocation2 + $0x78] sm:$0xff]
    %v122 = vld [vmem:[#allocation3] sm:$0xf]
    %v123 = vld [vmem:[#allocation3 + $0x4] sm:$0xf]
    %v124 = vld [vmem:[#allocation3 + $0x8] sm:$0xf]
    %v125 = vld [vmem:[#allocation3 + $0xc] sm:$0xf]
    %v126 = vld [vmem:[#allocation3 + $0x10] sm:$0xf]
    %v127 = vld [vmem:[#allocation3 + $0x14] sm:$0xf]
    %v128 = vld [vmem:[#allocation3 + $0x18] sm:$0xf]
    %v129 = vld [vmem:[#allocation3 + $0x1c] sm:$0xf]
    %v130 = vld [vmem:[#allocation3 + $0x20] sm:$0xf]
    %v131 = vld [vmem:[#allocation3 + $0x24] sm:$0xf]
    %v132 = vld [vmem:[#allocation3 + $0x28] sm:$0xf]
    %v133 = vld [vmem:[#allocation3 + $0x2c] sm:$0xf]
    %v134 = vld [vmem:[#allocation3 + $0x30] sm:$0xf]
    %v135 = vld [vmem:[#allocation3 + $0x34] sm:$0xf]
    %v136 = vld [vmem:[#allocation3 + $0x38] sm:$0xf]
    %v137 = vld [vmem:[#allocation3 + $0x3c] sm:$0xf]
    %v154 = vunpack.c.l.b16 %v122
    %v155 = vunpack.c.l.b16 %v123
    %v156 = vunpack.c.l.b16 %v124
    %v157 = vunpack.c.l.b16 %v125
    %v158 = vunpack.c.l.b16 %v126
    %v159 = vunpack.c.l.b16 %v127
    %v160 = vunpack.c.l.b16 %v128
    %v161 = vunpack.c.l.b16 %v129
    %v162 = vunpack.c.l.b16 %v130
    %v163 = vunpack.c.l.b16 %v131
    %v164 = vunpack.c.l.b16 %v132
    %v165 = vunpack.c.l.b16 %v133
    %v166 = vunpack.c.l.b16 %v134
    %v167 = vunpack.c.l.b16 %v135
    %v168 = vunpack.c.l.b16 %v136
    %v169 = vunpack.c.l.b16 %v137
    %v170 = vpack.c.b16 %v155, %v154
    %v171 = vpack.c.b16 %v157, %v156
    %v172 = vpack.c.b16 %v159, %v158
    %v173 = vpack.c.b16 %v161, %v160
    %v174 = vpack.c.b16 %v163, %v162
    %v175 = vpack.c.b16 %v165, %v164
    %v176 = vpack.c.b16 %v167, %v166
    %v177 = vpack.c.b16 %v169, %v168
    %v202 = vunpack.c.l.b16 %v90
    %v203 = vunpack.c.l.b16 %v91
    %v204 = vunpack.c.l.b16 %v92
    %v205 = vunpack.c.l.b16 %v93
    %v206 = vunpack.c.l.b16 %v94
    %v207 = vunpack.c.l.b16 %v95
    %v208 = vunpack.c.l.b16 %v96
    %v209 = vunpack.c.l.b16 %v97
    %v210 = vunpack.c.l.b16 %v98
    %v211 = vunpack.c.l.b16 %v99
    %v212 = vunpack.c.l.b16 %v100
    %v213 = vunpack.c.l.b16 %v101
    %v214 = vunpack.c.l.b16 %v102
    %v215 = vunpack.c.l.b16 %v103
    %v216 = vunpack.c.l.b16 %v104
    %v217 = vunpack.c.l.b16 %v105
    %v218 = vpack.c.b16 %v203, %v202
    %v219 = vpack.c.b16 %v205, %v204
    %v220 = vpack.c.b16 %v207, %v206
    %v221 = vpack.c.b16 %v209, %v208
    %v222 = vpack.c.b16 %v211, %v210
    %v223 = vpack.c.b16 %v213, %v212
    %v224 = vpack.c.b16 %v215, %v214
    %v225 = vpack.c.b16 %v217, %v216
    %234 = vmatpush.bf16.msra.mxu0 %v225
    %235 = vmatpush.bf16.msra.mxu0 %v224
    %236 = vmatpush.bf16.msra.mxu0 %v223
    %237 = vmatpush.bf16.msra.mxu0 %v222
    %238 = vmatpush.bf16.msra.mxu0 %v221
    %239 = vmatpush.bf16.msra.mxu0 %v220
    %240 = vmatpush.bf16.msra.mxu0 %v219
    %241 = vmatpush.bf16.msra.mxu0 %v218
    %242 = vmatmul.bf16.gmra.mxu0 %v170
    %v243 = vpop.f32.mrf.mxu0
    %v244 = vadd.f32 0.0, %v243
    %v245 = vpop.f32.mrf.mxu0
    %v246 = vadd.f32 0.0, %v245
    %247 = vmatmul.bf16.gmra.mxu0 %v171
    %v248 = vpop.f32.mrf.mxu0
    %v249 = vadd.f32 0.0, %v248
    %v250 = vpop.f32.mrf.mxu0
    %v251 = vadd.f32 0.0, %v250
    %252 = vmatmul.bf16.gmra.mxu0 %v172
    %v253 = vpop.f32.mrf.mxu0
    %v254 = vadd.f32 0.0, %v253
    %v255 = vpop.f32.mrf.mxu0
    %v256 = vadd.f32 0.0, %v255
    %257 = vmatmul.bf16.gmra.mxu0 %v173
    %v258 = vpop.f32.mrf.mxu0
    %v259 = vadd.f32 0.0, %v258
    %v260 = vpop.f32.mrf.mxu0
    %v261 = vadd.f32 0.0, %v260
    %262 = vmatmul.bf16.gmra.mxu0 %v174
    %v263 = vpop.f32.mrf.mxu0
    %v264 = vadd.f32 0.0, %v263
    %v265 = vpop.f32.mrf.mxu0
    %v266 = vadd.f32 0.0, %v265
    %267 = vmatmul.bf16.gmra.mxu0 %v175
    %v268 = vpop.f32.mrf.mxu0
    %v269 = vadd.f32 0.0, %v268
    %v270 = vpop.f32.mrf.mxu0
    %v271 = vadd.f32 0.0, %v270
    %272 = vmatmul.bf16.gmra.mxu0 %v176
    %v273 = vpop.f32.mrf.mxu0
    %v274 = vadd.f32 0.0, %v273
    %v275 = vpop.f32.mrf.mxu0
    %v276 = vadd.f32 0.0, %v275
    %277 = vmatmul.bf16.gmra.mxu0 %v177
    %v278 = vpop.f32.mrf.mxu0
    %v279 = vadd.f32 0.0, %v278
    %v280 = vpop.f32.mrf.mxu0
    %v281 = vadd.f32 0.0, %v280
    %282 = vdwg.mxu0
    %v283 = vadd.f32 %v106, %v244
    %v284 = vadd.f32 %v107, %v246
    %v285 = vadd.f32 %v108, %v249
    %v286 = vadd.f32 %v109, %v251
    %v287 = vadd.f32 %v110, %v254
    %v288 = vadd.f32 %v111, %v256
    %v289 = vadd.f32 %v112, %v259
    %v290 = vadd.f32 %v113, %v261
    %v291 = vadd.f32 %v114, %v264
    %v292 = vadd.f32 %v115, %v266
    %v293 = vadd.f32 %v116, %v269
    %v294 = vadd.f32 %v117, %v271
    %v295 = vadd.f32 %v118, %v274
    %v296 = vadd.f32 %v119, %v276
    %v297 = vadd.f32 %v120, %v279
    %v298 = vadd.f32 %v121, %v281
    %299 = vst [vmem:[#allocation2] sm:$0xff] %v283
    %300 = vst [vmem:[#allocation2 + $0x8] sm:$0xff] %v284
    %301 = vst [vmem:[#allocation2 + $0x10] sm:$0xff] %v285
    %302 = vst [vmem:[#allocation2 + $0x18] sm:$0xff] %v286
    %303 = vst [vmem:[#allocation2 + $0x20] sm:$0xff] %v287
    %304 = vst [vmem:[#allocation2 + $0x28] sm:$0xff] %v288
    %305 = vst [vmem:[#allocation2 + $0x30] sm:$0xff] %v289
    %306 = vst [vmem:[#allocation2 + $0x38] sm:$0xff] %v290
    %307 = vst [vmem:[#allocation2 + $0x40] sm:$0xff] %v291
    %308 = vst [vmem:[#allocation2 + $0x48] sm:$0xff] %v292
    %309 = vst [vmem:[#allocation2 + $0x50] sm:$0xff] %v293
    %310 = vst [vmem:[#allocation2 + $0x58] sm:$0xff] %v294
    %311 = vst [vmem:[#allocation2 + $0x60] sm:$0xff] %v295
    %312 = vst [vmem:[#allocation2 + $0x68] sm:$0xff] %v296
    %313 = vst [vmem:[#allocation2 + $0x70] sm:$0xff] %v297
    %314 = vst [vmem:[#allocation2 + $0x78] sm:$0xff] %v298
    // Predicated region
    $region34: #{tpu_custom_call.1} parent=1 // pred_check
      %p315 = pneg %p65
    $region35: #{tpu_custom_call.1} parent=1 // pred_check_branch
      %317 = sbr.rel (%p315) target = $region37
    $region36: #{tpu_custom_call.1} parent=1 // pred_region
      %v318 = vld [vmem:[#allocation2] sm:$0xff]
      %v319 = vld [vmem:[#allocation2 + $0x8] sm:$0xff]
      %v320 = vld [vmem:[#allocation2 + $0x10] sm:$0xff]
      %v321 = vld [vmem:[#allocation2 + $0x18] sm:$0xff]
      %v322 = vld [vmem:[#allocation2 + $0x20] sm:$0xff]
      %v323 = vld [vmem:[#allocation2 + $0x28] sm:$0xff]
      %v324 = vld [vmem:[#allocation2 + $0x30] sm:$0xff]
      %v325 = vld [vmem:[#allocation2 + $0x38] sm:$0xff]
      %v326 = vld [vmem:[#allocation2 + $0x40] sm:$0xff]
      %v327 = vld [vmem:[#allocation2 + $0x48] sm:$0xff]
      %v328 = vld [vmem:[#allocation2 + $0x50] sm:$0xff]
      %v329 = vld [vmem:[#allocation2 + $0x58] sm:$0xff]
      %v330 = vld [vmem:[#allocation2 + $0x60] sm:$0xff]
      %v331 = vld [vmem:[#allocation2 + $0x68] sm:$0xff]
      %v332 = vld [vmem:[#allocation2 + $0x70] sm:$0xff]
      %v333 = vld [vmem:[#allocation2 + $0x78] sm:$0xff]
      %v334 = vpack.c.bf16 %v319, %v318
      %v335 = vpack.c.bf16 %v321, %v320
      %v336 = vpack.c.bf16 %v323, %v322
      %v337 = vpack.c.bf16 %v325, %v324
      %v338 = vpack.c.bf16 %v327, %v326
      %v339 = vpack.c.bf16 %v329, %v328
      %v340 = vpack.c.bf16 %v331, %v330
      %v341 = vpack.c.bf16 %v333, %v332
      %v342 = vld [vmem:[#allocation8] sm:$0xf]
      %v343 = vld [vmem:[#allocation8 + $0x4] sm:$0xf]
      %v344 = vld [vmem:[#allocation8 + $0x8] sm:$0xf]
      %v345 = vld [vmem:[#allocation8 + $0xc] sm:$0xf]
      %v346 = vld [vmem:[#allocation8 + $0x10] sm:$0xf]
      %v347 = vld [vmem:[#allocation8 + $0x14] sm:$0xf]
      %v348 = vld [vmem:[#allocation8 + $0x18] sm:$0xf]
      %v349 = vld [vmem:[#allocation8 + $0x1c] sm:$0xf]
      %v350 = vld [vmem:[#allocation8 + $0x20] sm:$0xf]
      %v351 = vld [vmem:[#allocation8 + $0x24] sm:$0xf]
      %v352 = vld [vmem:[#allocation8 + $0x28] sm:$0xf]
      %v353 = vld [vmem:[#allocation8 + $0x2c] sm:$0xf]
      %v354 = vld [vmem:[#allocation8 + $0x30] sm:$0xf]
      %v355 = vld [vmem:[#allocation8 + $0x34] sm:$0xf]
      %v356 = vld [vmem:[#allocation8 + $0x38] sm:$0xf]
      %v357 = vld [vmem:[#allocation8 + $0x3c] sm:$0xf]
      %v358 = vld [vmem:[%s3] sm:$0x1]
      %v360 = vperm.slane %v358, 0
      %v378 = vunpack.c.l.b16 %v342
      %v379 = vunpack.c.l.b16 %v343
      %v380 = vunpack.c.l.b16 %v344
      %v381 = vunpack.c.l.b16 %v345
      %v382 = vunpack.c.l.b16 %v346
      %v383 = vunpack.c.l.b16 %v347
      %v384 = vunpack.c.l.b16 %v348
      %v385 = vunpack.c.l.b16 %v349
      %v386 = vunpack.c.l.b16 %v350
      %v387 = vunpack.c.l.b16 %v351
      %v388 = vunpack.c.l.b16 %v352
      %v389 = vunpack.c.l.b16 %v353
      %v390 = vunpack.c.l.b16 %v354
      %v391 = vunpack.c.l.b16 %v355
      %v392 = vunpack.c.l.b16 %v356
      %v393 = vunpack.c.l.b16 %v357
      %v394 = vpack.c.b16 %v379, %v378
      %v395 = vpack.c.b16 %v381, %v380
      %v396 = vpack.c.b16 %v383, %v382
      %v397 = vpack.c.b16 %v385, %v384
      %v398 = vpack.c.b16 %v387, %v386
      %v399 = vpack.c.b16 %v389, %v388
      %v400 = vpack.c.b16 %v391, %v390
      %v401 = vpack.c.b16 %v393, %v392
      %410 = vmatpush.bf16.msra.mxu0 %v401
      %411 = vmatpush.bf16.msra.mxu0 %v400
      %412 = vmatpush.bf16.msra.mxu0 %v399
      %413 = vmatpush.bf16.msra.mxu0 %v398
      %414 = vmatpush.bf16.msra.mxu0 %v397
      %415 = vmatpush.bf16.msra.mxu0 %v396
      %416 = vmatpush.bf16.msra.mxu0 %v395
      %417 = vmatpush.bf16.msra.mxu0 %v394
      %418 = vmatmul.bf16.gmra.mxu0 %v334
      %v419 = vpop.f32.mrf.mxu0
      %v420 = vadd.f32 %v360, %v419
      %v421 = vpop.f32.mrf.mxu0
      %v422 = vadd.f32 %v360, %v421
      %423 = vmatmul.bf16.gmra.mxu0 %v335
      %v424 = vpop.f32.mrf.mxu0
      %v425 = vadd.f32 %v360, %v424
      %v426 = vpop.f32.mrf.mxu0
      %v427 = vadd.f32 %v360, %v426
      %428 = vmatmul.bf16.gmra.mxu0 %v336
      %v429 = vpop.f32.mrf.mxu0
      %v430 = vadd.f32 %v360, %v429
      %v431 = vpop.f32.mrf.mxu0
      %v432 = vadd.f32 %v360, %v431
      %433 = vmatmul.bf16.gmra.mxu0 %v337
      %v434 = vpop.f32.mrf.mxu0
      %v435 = vadd.f32 %v360, %v434
      %v436 = vpop.f32.mrf.mxu0
      %v437 = vadd.f32 %v360, %v436
      %438 = vmatmul.bf16.gmra.mxu0 %v338
      %v439 = vpop.f32.mrf.mxu0
      %v440 = vadd.f32 %v360, %v439
      %v441 = vpop.f32.mrf.mxu0
      %v442 = vadd.f32 %v360, %v441
      %443 = vmatmul.bf16.gmra.mxu0 %v339
      %v444 = vpop.f32.mrf.mxu0
      %v445 = vadd.f32 %v360, %v444
      %v446 = vpop.f32.mrf.mxu0
      %v447 = vadd.f32 %v360, %v446
      %448 = vmatmul.bf16.gmra.mxu0 %v340
      %v449 = vpop.f32.mrf.mxu0
      %v450 = vadd.f32 %v360, %v449
      %v451 = vpop.f32.mrf.mxu0
      %v452 = vadd.f32 %v360, %v451
      %453 = vmatmul.bf16.gmra.mxu0 %v341
      %v454 = vpop.f32.mrf.mxu0
      %v455 = vadd.f32 %v360, %v454
      %v456 = vpop.f32.mrf.mxu0
      %v457 = vadd.f32 %v360, %v456
      %458 = vdwg.mxu0
      %v459 = vmax.f32 %v420, 0.0
      %v460 = vmax.f32 %v422, 0.0
      %v461 = vmax.f32 %v425, 0.0
      %v462 = vmax.f32 %v427, 0.0
      %v463 = vmax.f32 %v430, 0.0
      %v464 = vmax.f32 %v432, 0.0
      %v465 = vmax.f32 %v435, 0.0
      %v466 = vmax.f32 %v437, 0.0
      %v467 = vmax.f32 %v440, 0.0
      %v468 = vmax.f32 %v442, 0.0
      %v469 = vmax.f32 %v445, 0.0
      %v470 = vmax.f32 %v447, 0.0
      %v471 = vmax.f32 %v450, 0.0
      %v472 = vmax.f32 %v452, 0.0
      %v473 = vmax.f32 %v455, 0.0
      %v474 = vmax.f32 %v457, 0.0
      %v475 = vpack.c.bf16 %v459, %v459
      %v476 = vpack.c.bf16 %v460, %v460
      %v477 = vpack.c.bf16 %v461, %v461
      %v478 = vpack.c.bf16 %v462, %v462
      %v479 = vpack.c.bf16 %v463, %v463
      %v480 = vpack.c.bf16 %v464, %v464
      %v481 = vpack.c.bf16 %v465, %v465
      %v482 = vpack.c.bf16 %v466, %v466
      %v483 = vpack.c.bf16 %v467, %v467
      %v484 = vpack.c.bf16 %v468, %v468
      %v485 = vpack.c.bf16 %v469, %v469
      %v486 = vpack.c.bf16 %v470, %v470
      %v487 = vpack.c.bf16 %v471, %v471
      %v488 = vpack.c.bf16 %v472, %v472
      %v489 = vpack.c.bf16 %v473, %v473
      %v490 = vpack.c.bf16 %v474, %v474
      %491 = vst [vmem:[#allocation9] sm:$0xf] %v475
      %492 = vst [vmem:[#allocation9 + $0x4] sm:$0xf] %v476
      %493 = vst [vmem:[#allocation9 + $0x8] sm:$0xf] %v477
      %494 = vst [vmem:[#allocation9 + $0xc] sm:$0xf] %v478
      %495 = vst [vmem:[#allocation9 + $0x10] sm:$0xf] %v479
      %496 = vst [vmem:[#allocation9 + $0x14] sm:$0xf] %v480
      %497 = vst [vmem:[#allocation9 + $0x18] sm:$0xf] %v481
      %498 = vst [vmem:[#allocation9 + $0x1c] sm:$0xf] %v482
      %499 = vst [vmem:[#allocation9 + $0x20] sm:$0xf] %v483
      %500 = vst [vmem:[#allocation9 + $0x24] sm:$0xf] %v484
      %501 = vst [vmem:[#allocation9 + $0x28] sm:$0xf] %v485
      %502 = vst [vmem:[#allocation9 + $0x2c] sm:$0xf] %v486
      %503 = vst [vmem:[#allocation9 + $0x30] sm:$0xf] %v487
      %504 = vst [vmem:[#allocation9 + $0x34] sm:$0xf] %v488
      %505 = vst [vmem:[#allocation9 + $0x38] sm:$0xf] %v489
      %506 = vst [vmem:[#allocation9 + $0x3c] sm:$0xf] %v490
    $region37: #{tpu_custom_call.1} parent=1 // pred_fallthru
      _
    // Predicated region
    $region38: #{tpu_custom_call.1} parent=1 // pred_check
      _
    $region39: #{tpu_custom_call.1} parent=1 // pred_check_branch
      %508 = sbr.rel (0) target = $region41
    $region40: #{tpu_custom_call.1} parent=1 // pred_region
      %510 = vsyncadd [#allocation5], 0
      %s511 = sshll.u32 [#allocation9], 4
      %s512 = int_to_ptr.vmem [resolvable:$true] %s511
      %s513 = sshll.u32 %s4, 4
      %s514 = int_to_ptr.hbm [resolvable:$true] %s513
      %519 = dma.vmem_to_hbm [thread:$0]  %s512, 1024, %s514, [#allocation5], 64, 64, 4
    $region41: #{tpu_custom_call.1} parent=1 // pred_fallthru
      _
    // Predicated region
    $region42: #{tpu_custom_call.1} parent=1 // pred_check
      _
    $region43: #{tpu_custom_call.1} parent=1 // pred_check_branch
      %521 = sbr.rel (0) target = $region45
    $region44: #{tpu_custom_call.1} parent=1 // pred_region
      %523 = dma.done [#allocation5], 1024
    $region45: #{tpu_custom_call.1} parent=1 // pred_fallthru
      _
    %524 = vsyncpa [#allocation4], 1
    %525 = vsyncpa [#allocation7], 1
    %526 = vsyncpa [#allocation5], 1

</llo_original>
